<compile_context>
chip_gen: v5e
topology: v5e:2x2
jax: 0.10.0
libtpu: 0.0.40
codegen_flags: <defaults>
</compile_context>

<pallas_src>
import jax
import jax.numpy as jnp
from jax.experimental import pallas as pl
from jax.experimental.pallas import tpu as pltpu

K_IN = 128   # fc1 in_features
N_OUT = 32   # fc2 out_features


def _round_up(x, m):
    return ((x + m - 1) // m) * m


def subnet_kernel(x_ref, w_ref, b_ref, o_ref):
    # In-kernel bf16 cast of the activation tile (hidden under the DMA),
    # single MXU matmul with f32 accumulation, f32 bias add on the VPU.
    x_bf16 = x_ref[...].astype(jnp.bfloat16)
    y = jnp.dot(x_bf16, w_ref[...], preferred_element_type=jnp.float32)
    o_ref[...] = (y + b_ref[...]).astype(o_ref.dtype)


def fuse_subnet_params(w1, b1, w2, b2):
    """Algebraic fusion (valid: no nonlinearity between fc1 and fc2).

    Returns (w_fused [128,32] bf16, b_fused [1,32] f32).  Compute once at
    parameter-init time, not per forward call.
    NOTE: fusing in f32 and quantizing once to bf16 differs (slightly) from
    quantizing the two layers separately; documented, intentional.
    """
    w_fused = (w1 @ w2).astype(jnp.bfloat16)   # [128, 32]
    b_fused = (b1 @ w2 + b2).astype(jnp.float32)  # [1, 32]
    return w_fused, b_fused


def subnet_forward(x, w_fused, b_fused, *, tb=1024):
    """y = fc2(fc1(x)) with pre-fused params; x is f32 [B, 128]."""
    B, K = x.shape
    assert K == K_IN and w_fused.shape == (K_IN, N_OUT)

    # --- Batch tiling -----------------------------------------------------
    # Aim for >= 2 grid steps when B is large (so v7x's second TensorCore
    # gets half the batch), round the tile to a multiple of 16 (bf16 sublane
    # packing), and bound batch-pad waste to < 16 rows per grid step.
    n_steps = max(pl.cdiv(B, tb), 2 if B >= 512 else 1)
    TB = _round_up(pl.cdiv(B, n_steps), 16)
    B_pad = n_steps * TB

    x_in = x if B_pad == B else jnp.pad(x, ((0, B_pad - B), (0, 0)))

    cost = pl.CostEstimate(
        flops=2 * B_pad * K_IN * N_OUT,
        transcendentals=0,
        bytes_accessed=(B_pad * K_IN * 4          # x read (f32)
                        + K_IN * N_OUT * 2        # fused weight read (bf16)
                        + N_OUT * 4               # fused bias read (f32)
                        + B_pad * N_OUT * 4),     # output write (f32)
    )

    out = pl.pallas_call(
        subnet_kernel,
        out_shape=jax.ShapeDtypeStruct((B_pad, N_OUT), jnp.float32),
        grid=(n_steps,),
        in_specs=[
            pl.BlockSpec((TB, K_IN), lambda i: (i, 0)),      # x tile (pipelined)
            pl.BlockSpec((K_IN, N_OUT), lambda i: (0, 0)),   # fused weight (resident)
            pl.BlockSpec((1, N_OUT), lambda i: (0, 0)),      # fused bias   (resident)
        ],
        # Last dim (32) equals the full array dim -> narrow, valid out block.
        out_specs=pl.BlockSpec((TB, N_OUT), lambda i: (i, 0)),
        compiler_params=pltpu.CompilerParams(
            dimension_semantics=("parallel",)),              # megacore on v7x
        cost_estimate=cost,
    )(x_in, w_fused, b_fused)

    return out if B_pad == B else out[:B]


def init_linear_params(key, in_features, out_features, dtype=jnp.float32):
    # Mimics PyTorch default uniform(-1/sqrt(fan_in), +1/sqrt(fan_in)).
    kw, kb = jax.random.split(key)
    bound = 1.0 / jnp.sqrt(jnp.array(in_features, dtype=dtype))
    w = jax.random.uniform(kw, (in_features, out_features), dtype, -bound, bound)
    b = jax.random.uniform(kb, (1, out_features), dtype, -bound, bound)
    return w, b


# TODO(synk): if many SubNet instances run per step, stack their fused weights
# along N (>=128/256 wide) and call one kernel instead of one launch per module.

if __name__ == "__main__":
    key = jax.random.PRNGKey(0)
    k_x, k_fc1, k_fc2 = jax.random.split(key, 3)

    w1, b1 = init_linear_params(k_fc1, 128, 64)
    w2, b2 = init_linear_params(k_fc2, 64, 32)
    w_fused, b_fused = fuse_subnet_params(w1, b1, w2, b2)   # hoisted, once

    # --- small batch ------------------------------------------------------
    B = 8
    x = jax.random.normal(k_x, (B, 128), jnp.float32)
    out = jax.block_until_ready(subnet_forward(x, w_fused, b_fused))
    assert out.shape == (B, 32)

    # Kernel-exact reference (same fusion + bf16 quantization, f32 accumulate).
    wf_q = (w1 @ w2).astype(jnp.bfloat16).astype(jnp.float32)
    bf = b1 @ w2 + b2
    xq = x.astype(jnp.bfloat16).astype(jnp.float32)
    ref_exact = jnp.dot(xq, wf_q, precision=jax.lax.Precision.HIGHEST) + bf
    assert jnp.allclose(out, ref_exact, atol=2e-4, rtol=2e-4)

    # Module-semantics reference (full f32, two chained linears).
    ref_f32 = (x @ w1 + b1) @ w2 + b2
    assert jnp.allclose(out, ref_f32, atol=2e-2, rtol=2e-2)

    # --- pad-and-slice path (B not a multiple of 16) ------------------------
    B2 = 12
    x2 = jax.random.normal(jax.random.PRNGKey(1), (B2, 128), jnp.float32)
    out2 = jax.block_until_ready(subnet_forward(x2, w_fused, b_fused))
    ref2 = (x2 @ w1 + b1) @ w2 + b2
    assert out2.shape == (B2, 32)
    assert jnp.allclose(out2, ref2, atol=2e-2, rtol=2e-2)

    # --- multi-step grid path (B >= 512 -> 2 "parallel" grid steps) --------
    B3 = 600
    x3 = jax.random.normal(jax.random.PRNGKey(2), (B3, 128), jnp.float32)
    out3 = jax.block_until_ready(subnet_forward(x3, w_fused, b_fused))
    ref3 = (x3 @ w1 + b1) @ w2 + b2
    assert out3.shape == (B3, 32)
    assert jnp.allclose(out3, ref3, atol=2e-2, rtol=2e-2)

    print("KERNEL_OK")
</pallas_src>

<mosaic_0001>
module attributes {stable_mosaic.version = 11 : i64} {
  func.func @subnet_kernel(%arg0: i32, %arg1: memref<16x128xf32, #tpu.memory_space<vmem>>, %arg2: memref<128x32xbf16, #tpu.memory_space<vmem>>, %arg3: memref<1x32xf32, #tpu.memory_space<vmem>>, %arg4: memref<16x32xf32, #tpu.memory_space<vmem>>) attributes {dimension_semantics = [#tpu.dimension_semantics<parallel>], iteration_bounds = array<i64: 1>, scalar_prefetch = 0 : i64, scratch_operands = 0 : i64, tpu.core_type = #tpu.core_type<tc>, window_params = [{transform_indices = @transform_0, window_bounds = array<i64: 16, 128>}, {pipeline_mode = #tpu.pipeline_mode<synchronous>, transform_indices = @transform_1, window_bounds = array<i64: 128, 32>}, {pipeline_mode = #tpu.pipeline_mode<synchronous>, transform_indices = @transform_2, window_bounds = array<i64: 1, 32>}, {transform_indices = @transform_3, window_bounds = array<i64: 16, 32>}]} {
    %c0 = arith.constant 0 : index
    %c0_0 = arith.constant 0 : index
    %0 = vector.load %arg1[%c0, %c0_0] : memref<16x128xf32, #tpu.memory_space<vmem>>, vector<16x128xf32>
    %1 = arith.truncf %0 : vector<16x128xf32> to vector<16x128xbf16>
    %c0_1 = arith.constant 0 : index
    %c0_2 = arith.constant 0 : index
    %2 = vector.load %arg2[%c0_1, %c0_2] : memref<128x32xbf16, #tpu.memory_space<vmem>>, vector<128x32xbf16>
    %cst = arith.constant dense<0.000000e+00> : vector<16x32xf32>
    %3 = tpu.matmul %1, %2, %cst {dimension_numbers = #tpu.dot_dimension_numbers<[1], [0], [0], [1], [0, 0, 1, 1], [], []>} : vector<16x128xbf16>, vector<128x32xbf16>, vector<16x32xf32> -> vector<16x32xf32>
    %c0_3 = arith.constant 0 : index
    %c0_4 = arith.constant 0 : index
    %4 = vector.load %arg3[%c0_3, %c0_4] : memref<1x32xf32, #tpu.memory_space<vmem>>, vector<1x32xf32>
    %5 = vector.broadcast %4 : vector<1x32xf32> to vector<16x32xf32>
    %6 = arith.addf %3, %5 : vector<16x32xf32>
    %c0_5 = arith.constant 0 : index
    %c0_6 = arith.constant 0 : index
    %7 = vector.load %arg4[%c0_5, %c0_6] : memref<16x32xf32, #tpu.memory_space<vmem>>, vector<16x32xf32>
    tpu.vector_store %arg4[%c0_5, %c0_6], %6 {strides = array<i32>} : memref<16x32xf32, #tpu.memory_space<vmem>>, vector<16x32xf32>,
    return
  }
  func.func @transform_0(%arg0: i32) -> (i32, i32) {
    %c0_i32 = arith.constant 0 : i32
    %c0_i32_0 = arith.constant 0 : i32
    return %arg0, %c0_i32 : i32, i32
  }
  func.func @transform_1(%arg0: i32) -> (i32, i32) {
    %c0_i32 = arith.constant 0 : i32
    %c0_i32_0 = arith.constant 0 : i32
    %c0_i32_1 = arith.constant 0 : i32
    return %c0_i32, %c0_i32_0 : i32, i32
  }
  func.func @transform_2(%arg0: i32) -> (i32, i32) {
    %c0_i32 = arith.constant 0 : i32
    %c0_i32_0 = arith.constant 0 : i32
    %c0_i32_1 = arith.constant 0 : i32
    return %c0_i32, %c0_i32_0 : i32, i32
  }
  func.func @transform_3(%arg0: i32) -> (i32, i32) {
    %c0_i32 = arith.constant 0 : i32
    %c0_i32_0 = arith.constant 0 : i32
    return %arg0, %c0_i32 : i32, i32
  }
}

</mosaic_0001>

<llo_original>
// kernel: tpu_custom_call.1
$region0: #{tpu_custom_call.1}
  #allocation0 [shape = 'u32[]', space=smem, size = 0x4, offset = 0x4, fixed_abs, tag = 'smem constant byte address 0x4 - core index']
  #allocation1 [shape = 'u32[72,128]{1,0:T(1,128)}', space=vmem, size = 0x9000, scoped, tag = 'internal scratch']
  %s0 = inlined_call_operand.vmem [shape: f32[16,128], index: 0, kind: input, shape index: {}]
  %s1 = inlined_call_operand.vmem [shape: bf16[128,32], index: 1, kind: input, shape index: {}]
  %s2 = inlined_call_operand.vmem [shape: f32[1,32], index: 2, kind: input, shape index: {}]
  %s3 = inlined_call_operand.hbm [shape: f32[16,32], index: 3, kind: output, shape index: {}]
  %s4 = sld [smem:[#allocation0]]
  $region22: #{tpu_custom_call.1} parent=0
    _
  %s6 = ssub.s32 1, %s4
  %s7 = scalar_select 0, %s6, %s4
  $region1: #{tpu_custom_call.1} parent=0
    #allocation2 [shape = 'u8[8192]{0}', space=vmem, size = 0x2000, scoped, tag = 'output window, operand 0, single buffered']
    #allocation3 [shape = 's32[1]{0}', space=sflag, size = 0x4, scoped, tag = 'scoped memory for tpu_custom_call.1']
    %8 = vsyncpa [#allocation3], 0
    // Predicated region
    $region2: #{tpu_custom_call.1} parent=1 // pred_check
      _
    $region3: #{tpu_custom_call.1} parent=1 // pred_check_branch
      %10 = sbr.rel (0) target = $region5
    $region4: #{tpu_custom_call.1} parent=1 // pred_region
      _
    $region5: #{tpu_custom_call.1} parent=1 // pred_fallthru
      _
    // Predicated region
    $region6: #{tpu_custom_call.1} parent=1 // pred_check
      _
    $region7: #{tpu_custom_call.1} parent=1 // pred_check_branch
      %12 = sbr.rel (0) target = $region9
    $region8: #{tpu_custom_call.1} parent=1 // pred_region
      _
    $region9: #{tpu_custom_call.1} parent=1 // pred_fallthru
      _
    // Predicated region
    $region10: #{tpu_custom_call.1} parent=1 // pred_check
      _
    $region11: #{tpu_custom_call.1} parent=1 // pred_check_branch
      %14 = sbr.rel (0) target = $region13
    $region12: #{tpu_custom_call.1} parent=1 // pred_region
      _
    $region13: #{tpu_custom_call.1} parent=1 // pred_fallthru
      _
    %v15 = vld [vmem:[%s0] sm:$0xff]
    %v16 = vld [vmem:[%s0 + $0x8] sm:$0xff]
    %v17 = vpack.c.bf16 %v16, %v15
    %v18 = vld [vmem:[%s1] sm:$0xf]
    %v19 = vld [vmem:[%s1 + $0x4] sm:$0xf]
    %v20 = vld [vmem:[%s1 + $0x8] sm:$0xf]
    %v21 = vld [vmem:[%s1 + $0xc] sm:$0xf]
    %v22 = vld [vmem:[%s1 + $0x10] sm:$0xf]
    %v23 = vld [vmem:[%s1 + $0x14] sm:$0xf]
    %v24 = vld [vmem:[%s1 + $0x18] sm:$0xf]
    %v25 = vld [vmem:[%s1 + $0x1c] sm:$0xf]
    %v26 = vld [vmem:[%s1 + $0x20] sm:$0xf]
    %v27 = vld [vmem:[%s1 + $0x24] sm:$0xf]
    %v28 = vld [vmem:[%s1 + $0x28] sm:$0xf]
    %v29 = vld [vmem:[%s1 + $0x2c] sm:$0xf]
    %v30 = vld [vmem:[%s1 + $0x30] sm:$0xf]
    %v31 = vld [vmem:[%s1 + $0x34] sm:$0xf]
    %v32 = vld [vmem:[%s1 + $0x38] sm:$0xf]
    %v33 = vld [vmem:[%s1 + $0x3c] sm:$0xf]
    %v34 = vld [vmem:[%s2] sm:$0x1]
    %v36 = vperm.slane %v34, 0
    %v54 = vunpack.c.l.b16 %v18
    %v55 = vunpack.c.l.b16 %v19
    %v56 = vunpack.c.l.b16 %v20
    %v57 = vunpack.c.l.b16 %v21
    %v58 = vunpack.c.l.b16 %v22
    %v59 = vunpack.c.l.b16 %v23
    %v60 = vunpack.c.l.b16 %v24
    %v61 = vunpack.c.l.b16 %v25
    %v62 = vunpack.c.l.b16 %v26
    %v63 = vunpack.c.l.b16 %v27
    %v64 = vunpack.c.l.b16 %v28
    %v65 = vunpack.c.l.b16 %v29
    %v66 = vunpack.c.l.b16 %v30
    %v67 = vunpack.c.l.b16 %v31
    %v68 = vunpack.c.l.b16 %v32
    %v69 = vunpack.c.l.b16 %v33
    %v70 = vpack.c.b16 %v55, %v54
    %v71 = vpack.c.b16 %v57, %v56
    %v72 = vpack.c.b16 %v59, %v58
    %v73 = vpack.c.b16 %v61, %v60
    %v74 = vpack.c.b16 %v63, %v62
    %v75 = vpack.c.b16 %v65, %v64
    %v76 = vpack.c.b16 %v67, %v66
    %v77 = vpack.c.b16 %v69, %v68
    %86 = vmatpush.bf16.msra.mxu0 %v77
    %87 = vmatpush.bf16.msra.mxu0 %v76
    %88 = vmatpush.bf16.msra.mxu0 %v75
    %89 = vmatpush.bf16.msra.mxu0 %v74
    %90 = vmatpush.bf16.msra.mxu0 %v73
    %91 = vmatpush.bf16.msra.mxu0 %v72
    %92 = vmatpush.bf16.msra.mxu0 %v71
    %93 = vmatpush.bf16.msra.mxu0 %v70
    %94 = vmatmul.bf16.gmra.mxu0 %v17
    %v95 = vpop.f32.mrf.mxu0
    %v96 = vadd.f32 %v36, %v95
    %v97 = vpop.f32.mrf.mxu0
    %v98 = vadd.f32 %v36, %v97
    %99 = vdwg.mxu0
    %vm100 = vcmask 261120
    %101 = vst.msk [vmem:[#allocation2] sm:$0xff] %vm100, %v96
    %102 = vst.msk [vmem:[#allocation2 + $0x8] sm:$0xff] %vm100, %v98
    // Predicated region
    $region14: #{tpu_custom_call.1} parent=1 // pred_check
      _
    $region15: #{tpu_custom_call.1} parent=1 // pred_check_branch
      %104 = sbr.rel (0) target = $region17
    $region16: #{tpu_custom_call.1} parent=1 // pred_region
      %106 = vsyncadd [#allocation3], 0
      %s107 = sshll.u32 [#allocation2], 4
      %s108 = int_to_ptr.vmem [resolvable:$true] %s107
      %s109 = sshll.u32 %s3, 4
      %s110 = int_to_ptr.hbm [resolvable:$true] %s109
      %115 = dma.vmem_to_hbm [thread:$0]  %s108, 256, %s110, [#allocation3], 128, 128, 8
    $region17: #{tpu_custom_call.1} parent=1 // pred_fallthru
      _
    // Predicated region
    $region18: #{tpu_custom_call.1} parent=1 // pred_check
      _
    $region19: #{tpu_custom_call.1} parent=1 // pred_check_branch
      %117 = sbr.rel (0) target = $region21
    $region20: #{tpu_custom_call.1} parent=1 // pred_region
      %119 = dma.done [#allocation3], 256
    $region21: #{tpu_custom_call.1} parent=1 // pred_fallthru
      _
    %120 = vsyncpa [#allocation3], 1

</llo_original>
